<compile_context>
chip_gen: v5e
topology: v5e:2x2
jax: 0.10.0
libtpu: 0.0.40
codegen_flags: <defaults>
</compile_context>

<pallas_src>
import jax
import jax.numpy as jnp
import numpy as np
from jax.experimental import pallas as pl
from jax.experimental.pallas import tpu as pltpu

# ---- hyper-params (stand-ins for `params` in the original code) ------------
TIME_BUFFER_LIMIT = 8          # messages per sample
LEN_EMBEDDING = 16             # vocab of the length embedding
NUM_SENDERS = 4                # number of distinct senders
FEAT_PER_MSG = 14              # 1 time + 1 rel_time + 4 len_emb + 8 sender_emb
IN_DIM = FEAT_PER_MSG * TIME_BUFFER_LIMIT   # 112
HID = 64
OUT_DIM = 2
OUT_PAD = 8                    # output padded to 8 lanes, sliced to 2 outside
GROUP = 16                     # one-hot slots per (message, table) group
N_GROUPS = 2 * TIME_BUFFER_LIMIT            # 8 len groups + 8 sender groups
OH_W = GROUP * N_GROUPS                     # 256: fused one-hot width
TR_W = 2 * TIME_BUFFER_LIMIT                # 16: packed [times | rel_times]
BN_EPS = 1e-5
MAX_TILE = 1024                # batch rows per grid step (fits any VMEM gen)

assert LEN_EMBEDDING <= GROUP and NUM_SENDERS <= GROUP


# ---------------------------------------------------------------------------
# Pallas kernel: fused embed_state + 3x (Linear + folded-BN + ReLU) + head
# ---------------------------------------------------------------------------
def timenet_kernel(tr_ref, idx_ref, sel_ref, ac_ref, wtr_ref, b1_ref,
                   w2_ref, b2_ref, w3_ref, b3_ref, w4_ref, b4_ref, o_ref):
    tb = tr_ref.shape[0]

    # ---- fused embed_state + Linear1 (BN1 folded) ---------------------------
    # Packed indices (TB,16) -> (TB,256) one-hot.  Lane l belongs to group
    # g = l // 16 (len groups 0..7, sender groups 8..15) and is hot iff
    # idx[:, g] == l % 16.  The per-group broadcast of idx across its 16 lanes
    # is done with a tiny exact bf16 selection matmul.
    idx = idx_ref[...].astype(jnp.bfloat16)                       # exact ints
    rep = jnp.dot(idx, sel_ref[...], preferred_element_type=jnp.float32)
    off = (jax.lax.broadcasted_iota(jnp.int32, (tb, OH_W), 1)
           & (GROUP - 1)).astype(jnp.float32)
    onehot = (rep == off).astype(jnp.bfloat16)                    # (TB, 256)

    z1 = (jnp.dot(onehot, ac_ref[...], preferred_element_type=jnp.float32)
          + jnp.dot(tr_ref[...].astype(jnp.bfloat16), wtr_ref[...],
                    preferred_element_type=jnp.float32)
          + b1_ref[...])
    h = jnp.maximum(z1, 0.0)

    # ---- Linear2/3 (BN folded) + ReLU ---------------------------------------
    z2 = jnp.dot(h.astype(jnp.bfloat16), w2_ref[...],
                 preferred_element_type=jnp.float32) + b2_ref[...]
    h = jnp.maximum(z2, 0.0)
    z3 = jnp.dot(h.astype(jnp.bfloat16), w3_ref[...],
                 preferred_element_type=jnp.float32) + b3_ref[...]
    h = jnp.maximum(z3, 0.0)

    # ---- output head: col 0 -> sigmoid, col 1 -> relu + 0.001 ---------------
    z4 = jnp.dot(h.astype(jnp.bfloat16), w4_ref[...],
                 preferred_element_type=jnp.float32) + b4_ref[...]
    col = jax.lax.broadcasted_iota(jnp.int32, z4.shape, 1)
    o_ref[...] = jnp.where(col == 0, jax.nn.sigmoid(z4),
                           jnp.maximum(z4, 0.0) + 0.001)


def timenet_pallas(times, rel_times, len_idx, sender_idx, kp):
    """Raw per-message tensors -> (B, 2) f32 via one batch-tiled Pallas kernel."""
    B = times.shape[0]
    tb = B if B <= MAX_TILE else MAX_TILE
    grid = (pl.cdiv(B, tb),)

    # Pack the four (B, 8) inputs into two (B, 16) arrays (fewer DMAs/step).
    tr = jnp.concatenate([times, rel_times], axis=1).astype(jnp.float32)
    idx = jnp.concatenate([len_idx, sender_idx], axis=1).astype(jnp.int32)

    def batch_spec(width):
        return pl.BlockSpec((tb, width), lambda i: (i, 0))

    def const_spec(arr):               # weights: resident across all steps
        return pl.BlockSpec(arr.shape, lambda i: (0, 0))

    weights = (kp["sel"], kp["ac"], kp["wtr"], kp["b1"],
               kp["w2"], kp["b2"], kp["w3"], kp["b3"], kp["w4"], kp["b4"])

    flops_row = 2 * (TR_W * OH_W + OH_W * HID + TR_W * HID
                     + 2 * HID * HID + HID * OUT_PAD)
    w_bytes = sum(int(np.prod(w.shape)) * w.dtype.itemsize for w in weights)
    cost = pl.CostEstimate(
        flops=flops_row * B,
        transcendentals=B * OUT_PAD,
        bytes_accessed=B * (2 * 4 * TR_W + 4 * OUT_PAD) + w_bytes)

    out = pl.pallas_call(
        timenet_kernel,
        out_shape=jax.ShapeDtypeStruct((B, OUT_PAD), jnp.float32),
        grid=grid,
        in_specs=[batch_spec(TR_W), batch_spec(TR_W)]
                 + [const_spec(w) for w in weights],
        out_specs=batch_spec(OUT_PAD),
        compiler_params=pltpu.CompilerParams(
            dimension_semantics=("parallel",)),
        cost_estimate=cost,
    )(tr, idx, *weights)
    return out[:, :OUT_DIM]


timenet_forward = jax.jit(timenet_pallas)


# ---------------------------------------------------------------------------
# Parameter init ("torch layout") and conversion to the folded kernel layout
# ---------------------------------------------------------------------------
def init_params(key):
    ks = jax.random.split(key, 24)

    def lin(kw, kb, fan_in, fan_out):
        w = jax.random.normal(kw, (fan_in, fan_out), jnp.float32) * 0.05
        b = 0.05 * jax.random.normal(kb, (fan_out,), jnp.float32)
        return w, b

    w1, b1 = lin(ks[0], ks[1], IN_DIM, HID)
    w2, b2 = lin(ks[2], ks[3], HID, HID)
    w3, b3 = lin(ks[4], ks[5], HID, HID)
    w4, b4 = lin(ks[6], ks[7], HID, OUT_DIM)

    def bn(kg, kb, km, kv):
        g = 1.0 + 0.1 * jax.random.normal(kg, (HID,), jnp.float32)
        be = 0.1 * jax.random.normal(kb, (HID,), jnp.float32)
        rm = 0.1 * jax.random.normal(km, (HID,), jnp.float32)   # running mean
        rv = 0.5 + jax.random.uniform(kv, (HID,), jnp.float32)  # running var
        return g, be, rm, rv

    g1, be1, rm1, rv1 = bn(ks[8], ks[9], ks[10], ks[11])
    g2, be2, rm2, rv2 = bn(ks[12], ks[13], ks[14], ks[15])
    g3, be3, rm3, rv3 = bn(ks[16], ks[17], ks[18], ks[19])

    len_emb = jax.random.normal(ks[20], (LEN_EMBEDDING, 4), jnp.float32)
    senders_emb = jax.random.normal(ks[21], (NUM_SENDERS, 8), jnp.float32)

    return dict(w1=w1, b1=b1, w2=w2, b2=b2, w3=w3, b3=b3, w4=w4, b4=b4,
                g1=g1, be1=be1, rm1=rm1, rv1=rv1,
                g2=g2, be2=be2, rm2=rm2, rv2=rv2,
                g3=g3, be3=be3, rm3=rm3, rv3=rv3,
                len_emb=len_emb, senders_emb=senders_emb)


def prepare_params(raw):
    """Fold eval-mode BN into the Linears and the embedding tables into W1."""
    T, F = TIME_BUFFER_LIMIT, FEAT_PER_MSG

    def fold(w, b, g, be, rm, rv):
        s = g * jax.lax.rsqrt(rv + BN_EPS)                     # (HID,)
        return w * s[None, :], (b - rm) * s + be               # eval-mode BN

    w1e, b1e = fold(raw["w1"], raw["b1"], raw["g1"], raw["be1"],
                    raw["rm1"], raw["rv1"])
    w2e, b2e = fold(raw["w2"], raw["b2"], raw["g2"], raw["be2"],
                    raw["rm2"], raw["rv2"])
    w3e, b3e = fold(raw["w3"], raw["b3"], raw["g3"], raw["be3"],
                    raw["rm3"], raw["rv3"])

    w1m = w1e.reshape(T, F, HID)                               # per-message
    # time / relative-time rows -> (16, 64): rows [0..7]=time_t, [8..15]=rel_t
    wtr = jnp.concatenate([w1m[:, 0, :], w1m[:, 1, :]], axis=0)
    # Embedding tables folded into W1: one-hot row 16*t + j (len groups) and
    # 128 + 16*t + j (sender groups) already carries emb[j] @ W1-block_t.
    len_fold = jnp.einsum("jf,tfh->tjh", raw["len_emb"], w1m[:, 2:6, :])
    snd_fold = jnp.einsum("jf,tfh->tjh", raw["senders_emb"], w1m[:, 6:14, :])
    len_fold = jnp.pad(len_fold, ((0, 0), (0, GROUP - LEN_EMBEDDING), (0, 0)))
    snd_fold = jnp.pad(snd_fold, ((0, 0), (0, GROUP - NUM_SENDERS), (0, 0)))
    ac = jnp.concatenate([len_fold.reshape(T * GROUP, HID),
                          snd_fold.reshape(T * GROUP, HID)], axis=0)  # (256,64)

    # selection matrix: sel[g, l] = 1 iff l // 16 == g (broadcast idx -> lanes)
    sel = (jnp.arange(OH_W)[None, :] // GROUP
           == jnp.arange(N_GROUPS)[:, None]).astype(jnp.bfloat16)

    # lane-padded output head (2 -> 8 columns)
    w4p = jnp.zeros((HID, OUT_PAD), jnp.float32).at[:, :OUT_DIM].set(raw["w4"])
    b4p = jnp.zeros((1, OUT_PAD), jnp.float32).at[:, :OUT_DIM].set(raw["b4"])

    return dict(
        sel=sel,
        ac=ac.astype(jnp.bfloat16),
        wtr=wtr.astype(jnp.bfloat16),
        b1=b1e.reshape(1, HID),
        w2=w2e.astype(jnp.bfloat16), b2=b2e.reshape(1, HID),
        w3=w3e.astype(jnp.bfloat16), b3=b3e.reshape(1, HID),
        w4=w4p.astype(jnp.bfloat16), b4=b4p)


# ---------------------------------------------------------------------------
# Pure-JAX f32 reference (eval-mode BN, mirrors the PyTorch forward)
# ---------------------------------------------------------------------------
def timenet_reference(times, rel_times, len_idx, sender_idx, raw):
    le = raw["len_emb"][len_idx]                      # (B, T, 4)
    se = raw["senders_emb"][sender_idx]               # (B, T, 8)
    x = jnp.concatenate([times[..., None], rel_times[..., None], le, se],
                        axis=-1).reshape(times.shape[0], -1)

    def layer(h, w, b, g, be, rm, rv):
        z = h @ w + b
        z = (z - rm) * jax.lax.rsqrt(rv + BN_EPS) * g + be
        return jnp.maximum(z, 0.0)

    h = layer(x, raw["w1"], raw["b1"], raw["g1"], raw["be1"],
              raw["rm1"], raw["rv1"])
    h = layer(h, raw["w2"], raw["b2"], raw["g2"], raw["be2"],
              raw["rm2"], raw["rv2"])
    h = layer(h, raw["w3"], raw["b3"], raw["g3"], raw["be3"],
              raw["rm3"], raw["rv3"])
    z = h @ raw["w4"] + raw["b4"]
    return jnp.stack([jax.nn.sigmoid(z[:, 0]),
                      jnp.maximum(z[:, 1], 0.0) + 0.001], axis=1)


# ---------------------------------------------------------------------------
if __name__ == "__main__":
    key = jax.random.PRNGKey(0)
    kparam, kt, kr, kl, ksnd = jax.random.split(key, 5)

    B, T = 8, TIME_BUFFER_LIMIT
    raw = init_params(kparam)
    kp = prepare_params(raw)

    # Synthetic, deterministic "messages": normalized times, relative times,
    # clipped word counts, sender ids.
    times = jax.random.uniform(kt, (B, T), jnp.float32)
    rel_times = jax.random.uniform(kr, (B, T), jnp.float32)
    len_idx = jax.random.randint(kl, (B, T), 0, LEN_EMBEDDING, jnp.int32)
    sender_idx = jax.random.randint(ksnd, (B, T), 0, NUM_SENDERS, jnp.int32)

    out = timenet_forward(times, rel_times, len_idx, sender_idx, kp)
    out = jax.block_until_ready(out)

    assert out.shape == (B, OUT_DIM) and out.dtype == jnp.float32
    # column 0 is a sigmoid (in (0,1)), column 1 is relu(.)+0.001 (>= 0.001)
    assert bool(jnp.all((out[:, 0] > 0.0) & (out[:, 0] < 1.0)))
    assert bool(jnp.all(out[:, 1] >= 0.001))

    # Numerical check against the f32 reference (bf16 MXU feed -> loose tol).
    ref = timenet_reference(times, rel_times, len_idx, sender_idx, raw)
    np.testing.assert_allclose(np.asarray(out), np.asarray(ref),
                               rtol=5e-2, atol=5e-2)

    print("KERNEL_OK")
</pallas_src>

<mosaic_0001>
module attributes {stable_mosaic.version = 11 : i64} {
  func.func @timenet_kernel(%arg0: i32, %arg1: memref<8x16xf32, #tpu.memory_space<vmem>>, %arg2: memref<8x16xi32, #tpu.memory_space<vmem>>, %arg3: memref<16x256xbf16, #tpu.memory_space<vmem>>, %arg4: memref<256x64xbf16, #tpu.memory_space<vmem>>, %arg5: memref<16x64xbf16, #tpu.memory_space<vmem>>, %arg6: memref<1x64xf32, #tpu.memory_space<vmem>>, %arg7: memref<64x64xbf16, #tpu.memory_space<vmem>>, %arg8: memref<1x64xf32, #tpu.memory_space<vmem>>, %arg9: memref<64x64xbf16, #tpu.memory_space<vmem>>, %arg10: memref<1x64xf32, #tpu.memory_space<vmem>>, %arg11: memref<64x8xbf16, #tpu.memory_space<vmem>>, %arg12: memref<1x8xf32, #tpu.memory_space<vmem>>, %arg13: memref<8x8xf32, #tpu.memory_space<vmem>>) attributes {dimension_semantics = [#tpu.dimension_semantics<parallel>], iteration_bounds = array<i64: 1>, scalar_prefetch = 0 : i64, scratch_operands = 0 : i64, tpu.core_type = #tpu.core_type<tc>, window_params = [{transform_indices = @transform_0, window_bounds = array<i64: 8, 16>}, {transform_indices = @transform_1, window_bounds = array<i64: 8, 16>}, {pipeline_mode = #tpu.pipeline_mode<synchronous>, transform_indices = @transform_2, window_bounds = array<i64: 16, 256>}, {pipeline_mode = #tpu.pipeline_mode<synchronous>, transform_indices = @transform_3, window_bounds = array<i64: 256, 64>}, {pipeline_mode = #tpu.pipeline_mode<synchronous>, transform_indices = @transform_4, window_bounds = array<i64: 16, 64>}, {pipeline_mode = #tpu.pipeline_mode<synchronous>, transform_indices = @transform_5, window_bounds = array<i64: 1, 64>}, {pipeline_mode = #tpu.pipeline_mode<synchronous>, transform_indices = @transform_6, window_bounds = array<i64: 64, 64>}, {pipeline_mode = #tpu.pipeline_mode<synchronous>, transform_indices = @transform_7, window_bounds = array<i64: 1, 64>}, {pipeline_mode = #tpu.pipeline_mode<synchronous>, transform_indices = @transform_8, window_bounds = array<i64: 64, 64>}, {pipeline_mode = #tpu.pipeline_mode<synchronous>, transform_indices = @transform_9, window_bounds = array<i64: 1, 64>}, {pipeline_mode = #tpu.pipeline_mode<synchronous>, transform_indices = @transform_10, window_bounds = array<i64: 64, 8>}, {pipeline_mode = #tpu.pipeline_mode<synchronous>, transform_indices = @transform_11, window_bounds = array<i64: 1, 8>}, {transform_indices = @transform_12, window_bounds = array<i64: 8, 8>}]} {
    %c0 = arith.constant 0 : index
    %c0_0 = arith.constant 0 : index
    %0 = vector.load %arg2[%c0, %c0_0] : memref<8x16xi32, #tpu.memory_space<vmem>>, vector<8x16xi32>
    %1 = arith.sitofp %0 : vector<8x16xi32> to vector<8x16xbf16>
    %c0_1 = arith.constant 0 : index
    %c0_2 = arith.constant 0 : index
    %2 = vector.load %arg3[%c0_1, %c0_2] : memref<16x256xbf16, #tpu.memory_space<vmem>>, vector<16x256xbf16>
    %cst = arith.constant dense<0.000000e+00> : vector<8x256xf32>
    %3 = tpu.matmul %1, %2, %cst {dimension_numbers = #tpu.dot_dimension_numbers<[1], [0], [0], [1], [0, 0, 1, 1], [], []>} : vector<8x16xbf16>, vector<16x256xbf16>, vector<8x256xf32> -> vector<8x256xf32>
    %4 = tpu.iota {dimensions = array<i32: 1>} : vector<8x256xi32>
    %c15_i32 = arith.constant 15 : i32
    %5 = vector.broadcast %c15_i32 : i32 to vector<8x256xi32>
    %6 = arith.andi %4, %5 : vector<8x256xi32>
    %7 = arith.sitofp %6 : vector<8x256xi32> to vector<8x256xf32>
    %8 = arith.cmpf oeq, %3, %7 : vector<8x256xf32>
    %9 = arith.extui %8 : vector<8x256xi1> to vector<8x256xi32>
    %10 = arith.sitofp %9 : vector<8x256xi32> to vector<8x256xf32>
    %11 = arith.truncf %10 : vector<8x256xf32> to vector<8x256xbf16>
    %c0_3 = arith.constant 0 : index
    %c0_4 = arith.constant 0 : index
    %12 = vector.load %arg4[%c0_3, %c0_4] : memref<256x64xbf16, #tpu.memory_space<vmem>>, vector<256x64xbf16>
    %cst_5 = arith.constant dense<0.000000e+00> : vector<8x64xf32>
    %13 = tpu.matmul %11, %12, %cst_5 {dimension_numbers = #tpu.dot_dimension_numbers<[1], [0], [0], [1], [0, 0, 1, 1], [], []>} : vector<8x256xbf16>, vector<256x64xbf16>, vector<8x64xf32> -> vector<8x64xf32>
    %c0_6 = arith.constant 0 : index
    %c0_7 = arith.constant 0 : index
    %14 = vector.load %arg1[%c0_6, %c0_7] : memref<8x16xf32, #tpu.memory_space<vmem>>, vector<8x16xf32>
    %15 = arith.truncf %14 : vector<8x16xf32> to vector<8x16xbf16>
    %c0_8 = arith.constant 0 : index
    %c0_9 = arith.constant 0 : index
    %16 = vector.load %arg5[%c0_8, %c0_9] : memref<16x64xbf16, #tpu.memory_space<vmem>>, vector<16x64xbf16>
    %cst_10 = arith.constant dense<0.000000e+00> : vector<8x64xf32>
    %17 = tpu.matmul %15, %16, %cst_10 {dimension_numbers = #tpu.dot_dimension_numbers<[1], [0], [0], [1], [0, 0, 1, 1], [], []>} : vector<8x16xbf16>, vector<16x64xbf16>, vector<8x64xf32> -> vector<8x64xf32>
    %18 = arith.addf %13, %17 : vector<8x64xf32>
    %c0_11 = arith.constant 0 : index
    %c0_12 = arith.constant 0 : index
    %19 = vector.load %arg6[%c0_11, %c0_12] : memref<1x64xf32, #tpu.memory_space<vmem>>, vector<1x64xf32>
    %20 = vector.broadcast %19 : vector<1x64xf32> to vector<8x64xf32>
    %21 = arith.addf %18, %20 : vector<8x64xf32>
    %cst_13 = arith.constant 0.000000e+00 : f32
    %22 = vector.broadcast %cst_13 : f32 to vector<8x64xf32>
    %23 = arith.maximumf %21, %22 : vector<8x64xf32>
    %24 = arith.truncf %23 : vector<8x64xf32> to vector<8x64xbf16>
    %c0_14 = arith.constant 0 : index
    %c0_15 = arith.constant 0 : index
    %25 = vector.load %arg7[%c0_14, %c0_15] : memref<64x64xbf16, #tpu.memory_space<vmem>>, vector<64x64xbf16>
    %cst_16 = arith.constant dense<0.000000e+00> : vector<8x64xf32>
    %26 = tpu.matmul %24, %25, %cst_16 {dimension_numbers = #tpu.dot_dimension_numbers<[1], [0], [0], [1], [0, 0, 1, 1], [], []>} : vector<8x64xbf16>, vector<64x64xbf16>, vector<8x64xf32> -> vector<8x64xf32>
    %c0_17 = arith.constant 0 : index
    %c0_18 = arith.constant 0 : index
    %27 = vector.load %arg8[%c0_17, %c0_18] : memref<1x64xf32, #tpu.memory_space<vmem>>, vector<1x64xf32>
    %28 = vector.broadcast %27 : vector<1x64xf32> to vector<8x64xf32>
    %29 = arith.addf %26, %28 : vector<8x64xf32>
    %cst_19 = arith.constant 0.000000e+00 : f32
    %30 = vector.broadcast %cst_19 : f32 to vector<8x64xf32>
    %31 = arith.maximumf %29, %30 : vector<8x64xf32>
    %32 = arith.truncf %31 : vector<8x64xf32> to vector<8x64xbf16>
    %c0_20 = arith.constant 0 : index
    %c0_21 = arith.constant 0 : index
    %33 = vector.load %arg9[%c0_20, %c0_21] : memref<64x64xbf16, #tpu.memory_space<vmem>>, vector<64x64xbf16>
    %cst_22 = arith.constant dense<0.000000e+00> : vector<8x64xf32>
    %34 = tpu.matmul %32, %33, %cst_22 {dimension_numbers = #tpu.dot_dimension_numbers<[1], [0], [0], [1], [0, 0, 1, 1], [], []>} : vector<8x64xbf16>, vector<64x64xbf16>, vector<8x64xf32> -> vector<8x64xf32>
    %c0_23 = arith.constant 0 : index
    %c0_24 = arith.constant 0 : index
    %35 = vector.load %arg10[%c0_23, %c0_24] : memref<1x64xf32, #tpu.memory_space<vmem>>, vector<1x64xf32>
    %36 = vector.broadcast %35 : vector<1x64xf32> to vector<8x64xf32>
    %37 = arith.addf %34, %36 : vector<8x64xf32>
    %cst_25 = arith.constant 0.000000e+00 : f32
    %38 = vector.broadcast %cst_25 : f32 to vector<8x64xf32>
    %39 = arith.maximumf %37, %38 : vector<8x64xf32>
    %40 = arith.truncf %39 : vector<8x64xf32> to vector<8x64xbf16>
    %c0_26 = arith.constant 0 : index
    %c0_27 = arith.constant 0 : index
    %41 = vector.load %arg11[%c0_26, %c0_27] : memref<64x8xbf16, #tpu.memory_space<vmem>>, vector<64x8xbf16>
    %cst_28 = arith.constant dense<0.000000e+00> : vector<8x8xf32>
    %42 = tpu.matmul %40, %41, %cst_28 {dimension_numbers = #tpu.dot_dimension_numbers<[1], [0], [0], [1], [0, 0, 1, 1], [], []>} : vector<8x64xbf16>, vector<64x8xbf16>, vector<8x8xf32> -> vector<8x8xf32>
    %c0_29 = arith.constant 0 : index
    %c0_30 = arith.constant 0 : index
    %43 = vector.load %arg12[%c0_29, %c0_30] : memref<1x8xf32, #tpu.memory_space<vmem>>, vector<1x8xf32>
    %44 = vector.broadcast %43 : vector<1x8xf32> to vector<8x8xf32>
    %45 = arith.addf %42, %44 : vector<8x8xf32>
    %46 = tpu.iota {dimensions = array<i32: 1>} : vector<8x8xi32>
    %c0_i32 = arith.constant 0 : i32
    %47 = vector.broadcast %c0_i32 : i32 to vector<8x8xi32>
    %48 = arith.cmpi eq, %46, %47 : vector<8x8xi32>
    %49 = arith.negf %45 : vector<8x8xf32>
    %50 = math.exp %49 : vector<8x8xf32>
    %cst_31 = arith.constant 1.000000e+00 : f32
    %51 = vector.broadcast %cst_31 : f32 to vector<8x8xf32>
    %52 = arith.addf %51, %50 : vector<8x8xf32>
    %53 = arith.divf %51, %52 : vector<8x8xf32>
    %cst_32 = arith.constant 0.000000e+00 : f32
    %54 = vector.broadcast %cst_32 : f32 to vector<8x8xf32>
    %55 = arith.maximumf %45, %54 : vector<8x8xf32>
    %cst_33 = arith.constant 1.000000e-03 : f32
    %56 = vector.broadcast %cst_33 : f32 to vector<8x8xf32>
    %57 = arith.addf %55, %56 : vector<8x8xf32>
    %58 = arith.select %48, %53, %57 : vector<8x8xi1>, vector<8x8xf32>
    %c0_34 = arith.constant 0 : index
    %c0_35 = arith.constant 0 : index
    %59 = vector.load %arg13[%c0_34, %c0_35] : memref<8x8xf32, #tpu.memory_space<vmem>>, vector<8x8xf32>
    tpu.vector_store %arg13[%c0_34, %c0_35], %58 {strides = array<i32>} : memref<8x8xf32, #tpu.memory_space<vmem>>, vector<8x8xf32>,
    return
  }
  func.func @transform_0(%arg0: i32) -> (i32, i32) {
    %c0_i32 = arith.constant 0 : i32
    %c0_i32_0 = arith.constant 0 : i32
    return %arg0, %c0_i32 : i32, i32
  }
  func.func @transform_1(%arg0: i32) -> (i32, i32) {
    %c0_i32 = arith.constant 0 : i32
    %c0_i32_0 = arith.constant 0 : i32
    return %arg0, %c0_i32 : i32, i32
  }
  func.func @transform_2(%arg0: i32) -> (i32, i32) {
    %c0_i32 = arith.constant 0 : i32
    %c0_i32_0 = arith.constant 0 : i32
    %c0_i32_1 = arith.constant 0 : i32
    return %c0_i32, %c0_i32_0 : i32, i32
  }
  func.func @transform_3(%arg0: i32) -> (i32, i32) {
    %c0_i32 = arith.constant 0 : i32
    %c0_i32_0 = arith.constant 0 : i32
    %c0_i32_1 = arith.constant 0 : i32
    return %c0_i32, %c0_i32_0 : i32, i32
  }
  func.func @transform_4(%arg0: i32) -> (i32, i32) {
    %c0_i32 = arith.constant 0 : i32
    %c0_i32_0 = arith.constant 0 : i32
    %c0_i32_1 = arith.constant 0 : i32
    return %c0_i32, %c0_i32_0 : i32, i32
  }
  func.func @transform_5(%arg0: i32) -> (i32, i32) {
    %c0_i32 = arith.constant 0 : i32
    %c0_i32_0 = arith.constant 0 : i32
    %c0_i32_1 = arith.constant 0 : i32
    return %c0_i32, %c0_i32_0 : i32, i32
  }
  func.func @transform_6(%arg0: i32) -> (i32, i32) {
    %c0_i32 = arith.constant 0 : i32
    %c0_i32_0 = arith.constant 0 : i32
    %c0_i32_1 = arith.constant 0 : i32
    return %c0_i32, %c0_i32_0 : i32, i32
  }
  func.func @transform_7(%arg0: i32) -> (i32, i32) {
    %c0_i32 = arith.constant 0 : i32
    %c0_i32_0 = arith.constant 0 : i32
    %c0_i32_1 = arith.constant 0 : i32
    return %c0_i32, %c0_i32_0 : i32, i32
  }
  func.func @transform_8(%arg0: i32) -> (i32, i32) {
    %c0_i32 = arith.constant 0 : i32
    %c0_i32_0 = arith.constant 0 : i32
    %c0_i32_1 = arith.constant 0 : i32
    return %c0_i32, %c0_i32_0 : i32, i32
  }
  func.func @transform_9(%arg0: i32) -> (i32, i32) {
    %c0_i32 = arith.constant 0 : i32
    %c0_i32_0 = arith.constant 0 : i32
    %c0_i32_1 = arith.constant 0 : i32
    return %c0_i32, %c0_i32_0 : i32, i32
  }
  func.func @transform_10(%arg0: i32) -> (i32, i32) {
    %c0_i32 = arith.constant 0 : i32
    %c0_i32_0 = arith.constant 0 : i32
    %c0_i32_1 = arith.constant 0 : i32
    return %c0_i32, %c0_i32_0 : i32, i32
  }
  func.func @transform_11(%arg0: i32) -> (i32, i32) {
    %c0_i32 = arith.constant 0 : i32
    %c0_i32_0 = arith.constant 0 : i32
    %c0_i32_1 = arith.constant 0 : i32
    return %c0_i32, %c0_i32_0 : i32, i32
  }
  func.func @transform_12(%arg0: i32) -> (i32, i32) {
    %c0_i32 = arith.constant 0 : i32
    %c0_i32_0 = arith.constant 0 : i32
    return %arg0, %c0_i32 : i32, i32
  }
}

</mosaic_0001>

<llo_original>
// kernel: timenet_pallas.1
$region0: #{timenet_pallas.1}
  #allocation0 [shape = 'u32[]', space=smem, size = 0x4, offset = 0x4, fixed_abs, tag = 'smem constant byte address 0x4 - core index']
  #allocation1 [shape = 'u32[72,128]{1,0:T(1,128)}', space=vmem, size = 0x9000, scoped, tag = 'internal scratch']
  %s0 = inlined_call_operand.vmem [shape: f32[8,16], index: 0, kind: input, shape index: {}]
  %s1 = inlined_call_operand.vmem [shape: s32[8,16], index: 1, kind: input, shape index: {}]
  %s2 = inlined_call_operand.vmem [shape: bf16[16,256], index: 2, kind: input, shape index: {}]
  %s3 = inlined_call_operand.vmem [shape: bf16[256,64], index: 3, kind: input, shape index: {}]
  %s4 = inlined_call_operand.vmem [shape: bf16[16,64], index: 4, kind: input, shape index: {}]
  %s5 = inlined_call_operand.vmem [shape: f32[1,64], index: 5, kind: input, shape index: {}]
  %s6 = inlined_call_operand.vmem [shape: bf16[64,64], index: 6, kind: input, shape index: {}]
  %s7 = inlined_call_operand.vmem [shape: f32[1,64], index: 7, kind: input, shape index: {}]
  %s8 = inlined_call_operand.vmem [shape: bf16[64,64], index: 8, kind: input, shape index: {}]
  %s9 = inlined_call_operand.vmem [shape: f32[1,64], index: 9, kind: input, shape index: {}]
  %s10 = inlined_call_operand.vmem [shape: bf16[64,8], index: 10, kind: input, shape index: {}]
  %s11 = inlined_call_operand.vmem [shape: f32[1,8], index: 11, kind: input, shape index: {}]
  %s12 = inlined_call_operand.vmem [shape: f32[8,8], index: 12, kind: output, shape index: {}]
  %s13 = sld [smem:[#allocation0]]
  $region58: #{timenet_pallas.1} parent=0
    _
  %s15 = ssub.s32 1, %s13
  %s16 = scalar_select 0, %s15, %s13
  // Predicated region
  $region2: #{timenet_pallas.1} parent=0 // pred_check
    _
  $region3: #{timenet_pallas.1} parent=0 // pred_check_branch
    %18 = sbr.rel (0) target = $region5
  $region4: #{timenet_pallas.1} parent=0 // pred_region
    _
  $region5: #{timenet_pallas.1} parent=0 // pred_fallthru
    _
  // Predicated region
  $region6: #{timenet_pallas.1} parent=0 // pred_check
    _
  $region7: #{timenet_pallas.1} parent=0 // pred_check_branch
    %20 = sbr.rel (0) target = $region9
  $region8: #{timenet_pallas.1} parent=0 // pred_region
    _
  $region9: #{timenet_pallas.1} parent=0 // pred_fallthru
    _
  // Predicated region
  $region10: #{timenet_pallas.1} parent=0 // pred_check
    _
  $region11: #{timenet_pallas.1} parent=0 // pred_check_branch
    %22 = sbr.rel (0) target = $region13
  $region12: #{timenet_pallas.1} parent=0 // pred_region
    _
  $region13: #{timenet_pallas.1} parent=0 // pred_fallthru
    _
  // Predicated region
  $region14: #{timenet_pallas.1} parent=0 // pred_check
    _
  $region15: #{timenet_pallas.1} parent=0 // pred_check_branch
    %24 = sbr.rel (0) target = $region17
  $region16: #{timenet_pallas.1} parent=0 // pred_region
    _
  $region17: #{timenet_pallas.1} parent=0 // pred_fallthru
    _
  // Predicated region
  $region18: #{timenet_pallas.1} parent=0 // pred_check
    _
  $region19: #{timenet_pallas.1} parent=0 // pred_check_branch
    %26 = sbr.rel (0) target = $region21
  $region20: #{timenet_pallas.1} parent=0 // pred_region
    _
  $region21: #{timenet_pallas.1} parent=0 // pred_fallthru
    _
  // Predicated region
  $region22: #{timenet_pallas.1} parent=0 // pred_check
    _
  $region23: #{timenet_pallas.1} parent=0 // pred_check_branch
    %28 = sbr.rel (0) target = $region25
  $region24: #{timenet_pallas.1} parent=0 // pred_region
    _
  $region25: #{timenet_pallas.1} parent=0 // pred_fallthru
    _
  // Predicated region
  $region26: #{timenet_pallas.1} parent=0 // pred_check
    _
  $region27: #{timenet_pallas.1} parent=0 // pred_check_branch
    %30 = sbr.rel (0) target = $region29
  $region28: #{timenet_pallas.1} parent=0 // pred_region
    _
  $region29: #{timenet_pallas.1} parent=0 // pred_fallthru
    _
  // Predicated region
  $region30: #{timenet_pallas.1} parent=0 // pred_check
    _
  $region31: #{timenet_pallas.1} parent=0 // pred_check_branch
    %32 = sbr.rel (0) target = $region33
  $region32: #{timenet_pallas.1} parent=0 // pred_region
    _
  $region33: #{timenet_pallas.1} parent=0 // pred_fallthru
    _
  // Predicated region
  $region34: #{timenet_pallas.1} parent=0 // pred_check
    _
  $region35: #{timenet_pallas.1} parent=0 // pred_check_branch
    %34 = sbr.rel (0) target = $region37
  $region36: #{timenet_pallas.1} parent=0 // pred_region
    _
  $region37: #{timenet_pallas.1} parent=0 // pred_fallthru
    _
  // Predicated region
  $region38: #{timenet_pallas.1} parent=0 // pred_check
    _
  $region39: #{timenet_pallas.1} parent=0 // pred_check_branch
    %36 = sbr.rel (0) target = $region41
  $region40: #{timenet_pallas.1} parent=0 // pred_region
    _
  $region41: #{timenet_pallas.1} parent=0 // pred_fallthru
    _
  // Predicated region
  $region42: #{timenet_pallas.1} parent=0 // pred_check
    _
  $region43: #{timenet_pallas.1} parent=0 // pred_check_branch
    %38 = sbr.rel (0) target = $region45
  $region44: #{timenet_pallas.1} parent=0 // pred_region
    _
  $region45: #{timenet_pallas.1} parent=0 // pred_fallthru
    _
  // Predicated region
  $region46: #{timenet_pallas.1} parent=0 // pred_check
    _
  $region47: #{timenet_pallas.1} parent=0 // pred_check_branch
    %40 = sbr.rel (0) target = $region49
  $region48: #{timenet_pallas.1} parent=0 // pred_region
    _
  $region49: #{timenet_pallas.1} parent=0 // pred_fallthru
    _
  %v42 = vld [vmem:[%s1] sm:$0xff]
  %v43 = vcvt.s32.f32 %v42
  %v44 = vpack.c.bf16 %v43, %v43
  %v45 = vld [vmem:[%s2] sm:$0xff]
  %v46 = vld [vmem:[%s2 + $0x8] sm:$0xff]
  %v49 = vunpack.c.l.b16 %v45
  %v50 = vunpack.c.h.b16 %v45
  %v51 = vunpack.c.l.b16 %v46
  %v52 = vunpack.c.h.b16 %v46
  %v53 = vpack.c.b16 %v51, %v49
  %v54 = vpack.c.b16 %v52, %v50
  %vm57 = vcmask 130048
  %v59 = vsel %vm57, %v44, 0
  %61 = vmatpush.bf16.msra.mxu0 0
  %62 = vmatpush.bf16.msra.mxu0 0
  %63 = vmatpush.bf16.msra.mxu0 0
  %64 = vmatpush.bf16.msra.mxu0 0
  %65 = vmatpush.bf16.msra.mxu0 0
  %66 = vmatpush.bf16.msra.mxu0 0
  %67 = vmatpush.bf16.msra.mxu0 0
  %68 = vmatpush.bf16.msra.mxu0 %v53
  %69 = vmatmul.bf16.gmra.mxu0 %v59
  %v70 = vpop.f32.mrf.mxu0
  %v71 = vadd.f32 0.0, %v70
  %v72 = vpop.f32.mrf.mxu0
  %73 = vdwg.mxu0
  %74 = vmatpush.bf16.msra.mxu0 0
  %75 = vmatpush.bf16.msra.mxu0 0
  %76 = vmatpush.bf16.msra.mxu0 0
  %77 = vmatpush.bf16.msra.mxu0 0
  %78 = vmatpush.bf16.msra.mxu0 0
  %79 = vmatpush.bf16.msra.mxu0 0
  %80 = vmatpush.bf16.msra.mxu0 0
  %81 = vmatpush.bf16.msra.mxu0 %v54
  %82 = vmatmul.bf16.gmra.mxu0 %v59
  %v83 = vpop.f32.mrf.mxu0
  %v84 = vadd.f32 0.0, %v83
  %v85 = vpop.f32.mrf.mxu0
  %86 = vdwg.mxu0
  %v87 = vlaneseq
  %v88 = vand.u32 %v87, 127
  %v89 = vadd.s32 %v88, 128
  %v90 = vand.u32 %v88, 15
  %v91 = vand.u32 %v89, 15
  %v92 = vcvt.s32.f32 %v90
  %v93 = vcvt.s32.f32 %v91
  %vm94 = vcmp.eq.f32.partialorder %v71, %v92
  %vm95 = vcmp.eq.f32.partialorder %v84, %v93
  %v96 = vsel %vm94, 1, 0
  %v97 = vsel %vm95, 1, 0
  %v98 = vcvt.s32.f32 %v96
  %v99 = vcvt.s32.f32 %v97
  %v100 = vpack.c.bf16 %v98, %v98
  %v101 = vpack.c.bf16 %v99, %v99
  %v102 = vld [vmem:[%s3] sm:$0xf]
  %v103 = vld [vmem:[%s3 + $0x4] sm:$0xf]
  %v104 = vld [vmem:[%s3 + $0x8] sm:$0xf]
  %v105 = vld [vmem:[%s3 + $0xc] sm:$0xf]
  %v106 = vld [vmem:[%s3 + $0x10] sm:$0xf]
  %v107 = vld [vmem:[%s3 + $0x14] sm:$0xf]
  %v108 = vld [vmem:[%s3 + $0x18] sm:$0xf]
  %v109 = vld [vmem:[%s3 + $0x1c] sm:$0xf]
  %v110 = vld [vmem:[%s3 + $0x20] sm:$0xf]
  %v111 = vld [vmem:[%s3 + $0x24] sm:$0xf]
  %v112 = vld [vmem:[%s3 + $0x28] sm:$0xf]
  %v113 = vld [vmem:[%s3 + $0x2c] sm:$0xf]
  %v114 = vld [vmem:[%s3 + $0x30] sm:$0xf]
  %v115 = vld [vmem:[%s3 + $0x34] sm:$0xf]
  %v116 = vld [vmem:[%s3 + $0x38] sm:$0xf]
  %v117 = vld [vmem:[%s3 + $0x3c] sm:$0xf]
  %v118 = vld [vmem:[%s3 + $0x40] sm:$0xf]
  %v119 = vld [vmem:[%s3 + $0x44] sm:$0xf]
  %v120 = vld [vmem:[%s3 + $0x48] sm:$0xf]
  %v121 = vld [vmem:[%s3 + $0x4c] sm:$0xf]
  %v122 = vld [vmem:[%s3 + $0x50] sm:$0xf]
  %v123 = vld [vmem:[%s3 + $0x54] sm:$0xf]
  %v124 = vld [vmem:[%s3 + $0x58] sm:$0xf]
  %v125 = vld [vmem:[%s3 + $0x5c] sm:$0xf]
  %v126 = vld [vmem:[%s3 + $0x60] sm:$0xf]
  %v127 = vld [vmem:[%s3 + $0x64] sm:$0xf]
  %v128 = vld [vmem:[%s3 + $0x68] sm:$0xf]
  %v129 = vld [vmem:[%s3 + $0x6c] sm:$0xf]
  %v130 = vld [vmem:[%s3 + $0x70] sm:$0xf]
  %v131 = vld [vmem:[%s3 + $0x74] sm:$0xf]
  %v132 = vld [vmem:[%s3 + $0x78] sm:$0xf]
  %v133 = vld [vmem:[%s3 + $0x7c] sm:$0xf]
  %v134 = vld [vmem:[%s0] sm:$0xff]
  %v135 = vpack.c.bf16 %v134, %v134
  %v136 = vld [vmem:[%s4] sm:$0xf]
  %v137 = vld [vmem:[%s4 + $0x4] sm:$0xf]
  %v140 = vunpack.c.l.b16 %v136
  %v141 = vunpack.c.l.b16 %v137
  %v142 = vpack.c.b16 %v141, %v140
  %v145 = vsel %vm57, %v135, 0
  %147 = vmatpush.bf16.msra.mxu0 0
  %148 = vmatpush.bf16.msra.mxu0 0
  %149 = vmatpush.bf16.msra.mxu0 0
  %150 = vmatpush.bf16.msra.mxu0 0
  %151 = vmatpush.bf16.msra.mxu0 0
  %152 = vmatpush.bf16.msra.mxu0 0
  %153 = vmatpush.bf16.msra.mxu0 0
  %154 = vmatpush.bf16.msra.mxu0 %v142
  %155 = vmatmul.bf16.gmra.mxu0 %v145
  %v156 = vpop.f32.mrf.mxu0
  %v157 = vadd.f32 0.0, %v156
  %v158 = vpop.f32.mrf.mxu0
  %159 = vdwg.mxu0
  %v192 = vunpack.c.l.b16 %v102
  %v193 = vunpack.c.l.b16 %v103
  %v194 = vunpack.c.l.b16 %v104
  %v195 = vunpack.c.l.b16 %v105
  %v196 = vunpack.c.l.b16 %v106
  %v197 = vunpack.c.l.b16 %v107
  %v198 = vunpack.c.l.b16 %v108
  %v199 = vunpack.c.l.b16 %v109
  %v200 = vunpack.c.l.b16 %v110
  %v201 = vunpack.c.l.b16 %v111
  %v202 = vunpack.c.l.b16 %v112
  %v203 = vunpack.c.l.b16 %v113
  %v204 = vunpack.c.l.b16 %v114
  %v205 = vunpack.c.l.b16 %v115
  %v206 = vunpack.c.l.b16 %v116
  %v207 = vunpack.c.l.b16 %v117
  %v208 = vunpack.c.l.b16 %v118
  %v209 = vunpack.c.l.b16 %v119
  %v210 = vunpack.c.l.b16 %v120
  %v211 = vunpack.c.l.b16 %v121
  %v212 = vunpack.c.l.b16 %v122
  %v213 = vunpack.c.l.b16 %v123
  %v214 = vunpack.c.l.b16 %v124
  %v215 = vunpack.c.l.b16 %v125
  %v216 = vunpack.c.l.b16 %v126
  %v217 = vunpack.c.l.b16 %v127
  %v218 = vunpack.c.l.b16 %v128
  %v219 = vunpack.c.l.b16 %v129
  %v220 = vunpack.c.l.b16 %v130
  %v221 = vunpack.c.l.b16 %v131
  %v222 = vunpack.c.l.b16 %v132
  %v223 = vunpack.c.l.b16 %v133
  %v224 = vpack.c.b16 %v193, %v192
  %v225 = vpack.c.b16 %v195, %v194
  %v226 = vpack.c.b16 %v197, %v196
  %v227 = vpack.c.b16 %v199, %v198
  %v228 = vpack.c.b16 %v201, %v200
  %v229 = vpack.c.b16 %v203, %v202
  %v230 = vpack.c.b16 %v205, %v204
  %v231 = vpack.c.b16 %v207, %v206
  %v232 = vpack.c.b16 %v209, %v208
  %v233 = vpack.c.b16 %v211, %v210
  %v234 = vpack.c.b16 %v213, %v212
  %v235 = vpack.c.b16 %v215, %v214
  %v236 = vpack.c.b16 %v217, %v216
  %v237 = vpack.c.b16 %v219, %v218
  %v238 = vpack.c.b16 %v221, %v220
  %v239 = vpack.c.b16 %v223, %v222
  %256 = vmatpush.bf16.msra.mxu0 %v231
  %257 = vmatpush.bf16.msra.mxu0 %v230
  %258 = vmatpush.bf16.msra.mxu0 %v229
  %259 = vmatpush.bf16.msra.mxu0 %v228
  %260 = vmatpush.bf16.msra.mxu0 %v227
  %261 = vmatpush.bf16.msra.mxu0 %v226
  %262 = vmatpush.bf16.msra.mxu0 %v225
  %263 = vmatpush.bf16.msra.mxu0 %v224
  %264 = vmatmul.bf16.gmra.mxu0 %v100
  %v265 = vpop.f32.mrf.mxu0
  %v266 = vadd.f32 %v157, %v265
  %v267 = vpop.f32.mrf.mxu0
  %268 = vdwg.mxu0
  %269 = vmatpush.bf16.msra.mxu0 %v239
  %270 = vmatpush.bf16.msra.mxu0 %v238
  %271 = vmatpush.bf16.msra.mxu0 %v237
  %272 = vmatpush.bf16.msra.mxu0 %v236
  %273 = vmatpush.bf16.msra.mxu0 %v235
  %274 = vmatpush.bf16.msra.mxu0 %v234
  %275 = vmatpush.bf16.msra.mxu0 %v233
  %276 = vmatpush.bf16.msra.mxu0 %v232
  %277 = vmatmul.bf16.gmra.mxu0 %v101
  %v278 = vpop.f32.mrf.mxu0
  %v279 = vadd.f32 %v266, %v278
  %v280 = vpop.f32.mrf.mxu0
  %281 = vdwg.mxu0
  %v282 = vld [vmem:[%s5] sm:$0x1]
  %v284 = vperm.slane %v282, 0
  %v286 = vadd.f32 %v279, %v284
  %v287 = vmax.f32 %v286, 0.0
  %v288 = vpack.c.bf16 %v287, %v287
  %v289 = vld [vmem:[%s6] sm:$0xf]
  %v290 = vld [vmem:[%s6 + $0x4] sm:$0xf]
  %v291 = vld [vmem:[%s6 + $0x8] sm:$0xf]
  %v292 = vld [vmem:[%s6 + $0xc] sm:$0xf]
  %v293 = vld [vmem:[%s6 + $0x10] sm:$0xf]
  %v294 = vld [vmem:[%s6 + $0x14] sm:$0xf]
  %v295 = vld [vmem:[%s6 + $0x18] sm:$0xf]
  %v296 = vld [vmem:[%s6 + $0x1c] sm:$0xf]
  %v297 = vld [vmem:[%s7] sm:$0x1]
  %v299 = vperm.slane %v297, 0
  %v309 = vunpack.c.l.b16 %v289
  %v310 = vunpack.c.l.b16 %v290
  %v311 = vunpack.c.l.b16 %v291
  %v312 = vunpack.c.l.b16 %v292
  %v313 = vunpack.c.l.b16 %v293
  %v314 = vunpack.c.l.b16 %v294
  %v315 = vunpack.c.l.b16 %v295
  %v316 = vunpack.c.l.b16 %v296
  %v317 = vpack.c.b16 %v310, %v309
  %v318 = vpack.c.b16 %v312, %v311
  %v319 = vpack.c.b16 %v314, %v313
  %v320 = vpack.c.b16 %v316, %v315
  %vm325 = vcmask 523264
  %v327 = vsel %vm325, %v288, 0
  %329 = vmatpush.bf16.msra.mxu0 0
  %330 = vmatpush.bf16.msra.mxu0 0
  %331 = vmatpush.bf16.msra.mxu0 0
  %332 = vmatpush.bf16.msra.mxu0 0
  %333 = vmatpush.bf16.msra.mxu0 %v320
  %334 = vmatpush.bf16.msra.mxu0 %v319
  %335 = vmatpush.bf16.msra.mxu0 %v318
  %336 = vmatpush.bf16.msra.mxu0 %v317
  %337 = vmatmul.bf16.gmra.mxu0 %v327
  %v338 = vpop.f32.mrf.mxu0
  %v339 = vadd.f32 %v299, %v338
  %v340 = vpop.f32.mrf.mxu0
  %341 = vdwg.mxu0
  %v342 = vmax.f32 %v339, 0.0
  %v343 = vpack.c.bf16 %v342, %v342
  %v344 = vld [vmem:[%s8] sm:$0xf]
  %v345 = vld [vmem:[%s8 + $0x4] sm:$0xf]
  %v346 = vld [vmem:[%s8 + $0x8] sm:$0xf]
  %v347 = vld [vmem:[%s8 + $0xc] sm:$0xf]
  %v348 = vld [vmem:[%s8 + $0x10] sm:$0xf]
  %v349 = vld [vmem:[%s8 + $0x14] sm:$0xf]
  %v350 = vld [vmem:[%s8 + $0x18] sm:$0xf]
  %v351 = vld [vmem:[%s8 + $0x1c] sm:$0xf]
  %v352 = vld [vmem:[%s9] sm:$0x1]
  %v354 = vperm.slane %v352, 0
  %v364 = vunpack.c.l.b16 %v344
  %v365 = vunpack.c.l.b16 %v345
  %v366 = vunpack.c.l.b16 %v346
  %v367 = vunpack.c.l.b16 %v347
  %v368 = vunpack.c.l.b16 %v348
  %v369 = vunpack.c.l.b16 %v349
  %v370 = vunpack.c.l.b16 %v350
  %v371 = vunpack.c.l.b16 %v351
  %v372 = vpack.c.b16 %v365, %v364
  %v373 = vpack.c.b16 %v367, %v366
  %v374 = vpack.c.b16 %v369, %v368
  %v375 = vpack.c.b16 %v371, %v370
  %v381 = vsel %vm325, %v343, 0
  %383 = vmatpush.bf16.msra.mxu0 0
  %384 = vmatpush.bf16.msra.mxu0 0
  %385 = vmatpush.bf16.msra.mxu0 0
  %386 = vmatpush.bf16.msra.mxu0 0
  %387 = vmatpush.bf16.msra.mxu0 %v375
  %388 = vmatpush.bf16.msra.mxu0 %v374
  %389 = vmatpush.bf16.msra.mxu0 %v373
  %390 = vmatpush.bf16.msra.mxu0 %v372
  %391 = vmatmul.bf16.gmra.mxu0 %v381
  %v392 = vpop.f32.mrf.mxu0
  %v393 = vadd.f32 %v354, %v392
  %v394 = vpop.f32.mrf.mxu0
  %395 = vdwg.mxu0
  %v396 = vmax.f32 %v393, 0.0
  %v397 = vpack.c.bf16 %v396, %v396
  %v398 = vld [vmem:[%s10] sm:$0xf]
  %v399 = vld [vmem:[%s10 + $0x4] sm:$0xf]
  %v400 = vld [vmem:[%s10 + $0x8] sm:$0xf]
  %v401 = vld [vmem:[%s10 + $0xc] sm:$0xf]
  %v402 = vld [vmem:[%s10 + $0x10] sm:$0xf]
  %v403 = vld [vmem:[%s10 + $0x14] sm:$0xf]
  %v404 = vld [vmem:[%s10 + $0x18] sm:$0xf]
  %v405 = vld [vmem:[%s10 + $0x1c] sm:$0xf]
  %v406 = vld [vmem:[%s11] sm:$0x1]
  %v408 = vperm.slane %v406, 0
  %v418 = vunpack.c.l.b16 %v398
  %v419 = vunpack.c.l.b16 %v399
  %v420 = vunpack.c.l.b16 %v400
  %v421 = vunpack.c.l.b16 %v401
  %v422 = vunpack.c.l.b16 %v402
  %v423 = vunpack.c.l.b16 %v403
  %v424 = vunpack.c.l.b16 %v404
  %v425 = vunpack.c.l.b16 %v405
  %v426 = vpack.c.b16 %v419, %v418
  %v427 = vpack.c.b16 %v421, %v420
  %v428 = vpack.c.b16 %v423, %v422
  %v429 = vpack.c.b16 %v425, %v424
  %v435 = vsel %vm325, %v397, 0
  %437 = vmatpush.bf16.msra.mxu0 0
  %438 = vmatpush.bf16.msra.mxu0 0
  %439 = vmatpush.bf16.msra.mxu0 0
  %440 = vmatpush.bf16.msra.mxu0 0
  %441 = vmatpush.bf16.msra.mxu0 %v429
  %442 = vmatpush.bf16.msra.mxu0 %v428
  %443 = vmatpush.bf16.msra.mxu0 %v427
  %444 = vmatpush.bf16.msra.mxu0 %v426
  %445 = vmatmul.bf16.gmra.mxu0 %v435
  %v446 = vpop.f32.mrf.mxu0
  %v447 = vadd.f32 %v408, %v446
  %v448 = vpop.f32.mrf.mxu0
  %449 = vdwg.mxu0
  %vm450 = vcmp.eq.s32.totalorder %v88, 0
  %v451 = vxor.u32 %v447, 2147483648
  %v452 = vmul.f32 %v451, 1.442695
  %v453 = vpow.pop %v452
  %v454 = vadd.f32 %v453, 1.0
  %v455 = vrcp.pop %v454
  %v456 = vmul.f32 %v454, %v455
  %v457 = vsub.f32 1.0, %v456
  %v458 = vmul.f32 %v455, %v457
  %v459 = vadd.f32 %v455, %v458
  %vm460 = vweird.f32 %v454
  %vm461 = vweird.f32 %v455
  %vm462 = vmor %vm460, %vm461
  %v463 = vsel %vm462, %v455, %v459
  %v464 = vand.u32 2147483647, %v454
  %vm465 = vcmp.eq.f32.partialorder %v464, 8.507059e+37
  %v466 = vand.u32 %v454, 2147483648
  %v467 = vor.u32 1.1754944e-38, %v466
  %v468 = vsel %vm465, %v467, %v463
  %v469 = vmul.f32 1.0, %v468
  %v470 = vmax.f32 %v447, 0.0
  %v471 = vadd.f32 %v470, 0.001
  %v472 = vsel %vm450, %v469, %v471
  %vm473 = vcmask 64512
  %474 = vst.msk [vmem:[%s12] sm:$0xff] %vm473, %v472
  // Predicated region
  $region50: #{timenet_pallas.1} parent=0 // pred_check
    _
  $region51: #{timenet_pallas.1} parent=0 // pred_check_branch
    %476 = sbr.rel (0) target = $region53
  $region52: #{timenet_pallas.1} parent=0 // pred_region
    _
  $region53: #{timenet_pallas.1} parent=0 // pred_fallthru
    _
  // Predicated region
  $region54: #{timenet_pallas.1} parent=0 // pred_check
    _
  $region55: #{timenet_pallas.1} parent=0 // pred_check_branch
    %478 = sbr.rel (0) target = $region57
  $region56: #{timenet_pallas.1} parent=0 // pred_region
    _
  $region57: #{timenet_pallas.1} parent=0 // pred_fallthru
    _

</llo_original>
